<compile_context>
chip_gen: v7x
topology: tpu7x:2x2x1
jax: 0.10.0
libtpu: 0.0.40
codegen_flags: <defaults>
</compile_context>

<pallas_src>
import functools
import math

import jax
import jax.numpy as jnp
from jax import lax
from jax.experimental import pallas as pl
from jax.experimental.pallas import tpu as pltpu


# ----------------------------------------------------------------------------
# Pallas kernel: fused shift-stack + single MXU matmul per batch block
# ----------------------------------------------------------------------------
def _dcf_kernel(x_ref, w2_ref, bias_ref, out_ref, col_ref, *, k, wp, c, nb, l_pad):
    # x_ref:    (Nb, C, Lp)        zero-padded input, spatial flattened on lanes
    # w2_ref:   (O, k*k*C)         bases folded into per-offset 1x1 weights
    # bias_ref: (O, 1)
    # out_ref:  (Nb, O, L_pad)     L_pad = round_up(H1*Wp, 128) (lane-dense)
    # col_ref:  (k*k*C, L_pad)     VMEM scratch holding the shifted-view stack
    w2 = w2_ref[...]               # hoisted: VMEM-resident, loaded once per step
    bias = bias_ref[...]
    for n in range(nb):            # short static unroll over the batch block
        # Build the k*k shifted views once (rotate cost paid a single time),
        # then contract all k*k*C rows in ONE MXU push.
        for di in range(k):
            for dj in range(k):
                t = di * k + dj
                off = di * wp + dj                       # static lane offset
                col_ref[t * c:(t + 1) * c, :] = x_ref[n, :, off:off + l_pad]
        acc = jnp.dot(w2, col_ref[...], preferred_element_type=jnp.float32)
        out_ref[n] = (acc + bias).astype(out_ref.dtype)  # (O, L_pad)


# ----------------------------------------------------------------------------
# Wrapper
# ----------------------------------------------------------------------------
def conv_dcf_forward(x, bases, weight, bias, *, stride=1, padding=0,
                     batch_block=None, compute_dtype=jnp.float32):
    """x: (N, C, H, W). bases: (B, 1, k, k). weight: (O, C*B, 1, 1). bias: (O,)."""
    N, C, H, W = x.shape
    Bn, _, k, _ = bases.shape
    O = weight.shape[0]

    Hp, Wp = H + 2 * padding, W + 2 * padding
    H_out = (Hp - k) // stride + 1
    W_out = (Wp - k) // stride + 1
    H1, W1 = Hp - k + 1, Wp - k + 1          # stride-1 valid window starts
    L = H1 * Wp                              # lane-dense output length per (n, o)
    L_pad = ((L + 127) // 128) * 128         # unmasked-vst output lane length
    max_off = (k - 1) * Wp + (k - 1)         # largest static shift offset
    Lp = ((max(Hp * Wp, max_off + L_pad) + 127) // 128) * 128  # padded input lanes

    # Batch block: largest divisor of N that still leaves >= 2 grid steps, so
    # both v7x TensorCores get work while larger N amortizes per-step overhead.
    if batch_block is None:
        target = max(1, N // 2)
        batch_block = max(d for d in range(1, target + 1) if N % d == 0)
    Nb = batch_block
    assert N % Nb == 0, "batch_block must divide N"
    G = N // Nb

    # Zero-pad spatially, flatten spatial dims onto the lane axis, pad the tail
    # so every shifted window read stays in-bounds (no 9x im2col expansion).
    xp = jnp.pad(
        x.astype(jnp.float32),
        ((0, 0), (0, 0), (padding, padding), (padding, padding)),
    )
    xflat = xp.reshape(N, C, Hp * Wp)
    xflat = jnp.pad(xflat, ((0, 0), (0, 0), (0, Lp - Hp * Wp)))
    xflat = xflat.astype(compute_dtype)

    # Fold the bases into the 1x1-conv weights (channel index is c*B + b):
    #   W2[o, (di*k+dj)*C + c] = sum_b weight[o, c*B+b] * bases[b, 0, di, dj]
    b2 = bases.reshape(Bn, k * k).astype(jnp.float32)       # (B, K2)
    w3 = weight.reshape(O, C, Bn).astype(jnp.float32)       # (O, C, B)
    w2 = jnp.einsum("ocb,bk->okc", w3, b2).reshape(O, k * k * C)
    w2 = w2.astype(compute_dtype)                            # (O, K2*C)
    bias_col = bias.reshape(O, 1).astype(jnp.float32)        # (O, 1)

    kernel = functools.partial(_dcf_kernel, k=k, wp=Wp, c=C, nb=Nb, l_pad=L_pad)

    out_full = pl.pallas_call(
        kernel,
        out_shape=jax.ShapeDtypeStruct((N, O, L_pad), jnp.float32),
        grid=(G,),
        in_specs=[
            pl.BlockSpec((Nb, C, Lp), lambda g: (g, 0, 0)),
            pl.BlockSpec((O, k * k * C), lambda g: (0, 0)),   # grid-invariant
            pl.BlockSpec((O, 1), lambda g: (0, 0)),           # grid-invariant
        ],
        out_specs=pl.BlockSpec((Nb, O, L_pad), lambda g: (g, 0, 0)),
        scratch_shapes=[pltpu.VMEM((k * k * C, L_pad), compute_dtype)],
        compiler_params=pltpu.CompilerParams(
            dimension_semantics=("parallel",)
        ),
    )(xflat, w2, bias_col)

    # (N, O, L_pad) -> crop / stride back to NCHW.  Pure slice + reshape; at
    # this size the strided crop copy is noise (see TODO above for big layers).
    out_grid = out_full[:, :, :L].reshape(N, O, H1, Wp)
    out = out_grid[:, :, ::stride, ::stride][:, :, :H_out, :W_out]
    return out


# ----------------------------------------------------------------------------
# Pure-JAX reference (for correctness check)
# ----------------------------------------------------------------------------
def conv_dcf_reference(x, bases, weight, bias, *, stride=1, padding=0):
    N, C, H, W = x.shape
    Bn, _, k, _ = bases.shape
    O = weight.shape[0]
    xi = x.reshape(N * C, 1, H, W)
    feat = lax.conv_general_dilated(
        xi, bases, window_strides=(stride, stride),
        padding=[(padding, padding), (padding, padding)],
        dimension_numbers=("NCHW", "OIHW", "NCHW"),
    )  # (N*C, B, H_out, W_out)
    H_out, W_out = feat.shape[2], feat.shape[3]
    feat = feat.reshape(N, C * Bn, H_out, W_out)
    w = weight.reshape(O, C * Bn)
    out = jnp.einsum("ncp,oc->nop", feat.reshape(N, C * Bn, H_out * W_out), w)
    out = out + bias[None, :, None]
    return out.reshape(N, O, H_out, W_out)


if __name__ == "__main__":
    # Module hyper-parameters (small, consistent with Conv_DCF.__init__)
    in_channels = 4
    out_channels = 8
    kernel_size = 3
    stride = 1
    padding = 1
    num_bases = 6

    N, H, W = 2, 16, 16

    key = jax.random.PRNGKey(0)
    kx, kb, kw, kbi = jax.random.split(key, 4)

    # Deterministic parameter init.
    # TODO(synk): FB (Fourier-Bessel) basis init (calculate_FB_bases) not
    # reproduced; using the module's 'random' initializer path instead.
    bases = (jax.random.uniform(kb, (num_bases, 1, kernel_size, kernel_size),
                                jnp.float32) - 0.5)
    stdv = 1.0 / math.sqrt(in_channels * num_bases)
    weight = jax.random.uniform(kw, (out_channels, in_channels * num_bases, 1, 1),
                                jnp.float32, minval=-stdv, maxval=stdv)
    bias = jax.random.uniform(kbi, (out_channels,), jnp.float32,
                              minval=-stdv, maxval=stdv)

    x = jax.random.normal(kx, (N, in_channels, H, W), jnp.float32)

    out = conv_dcf_forward(x, bases, weight, bias, stride=stride, padding=padding)
    out = jax.block_until_ready(out)

    ref = conv_dcf_reference(x, bases, weight, bias, stride=stride, padding=padding)
    ref = jax.block_until_ready(ref)

    assert out.shape == (N, out_channels, H, W), out.shape
    assert jnp.allclose(out, ref, atol=1e-4, rtol=1e-4), "mismatch vs reference"

    print("KERNEL_OK")
</pallas_src>

<mosaic_0001>
module attributes {stable_mosaic.version = 11 : i64} {
  func.func @_dcf_kernel(%arg0: i32, %arg1: memref<1x4x512xf32, #tpu.memory_space<vmem>>, %arg2: memref<8x36xf32, #tpu.memory_space<vmem>>, %arg3: memref<8x1xf32, #tpu.memory_space<vmem>>, %arg4: memref<1x8x384xf32, #tpu.memory_space<vmem>>, %arg5: memref<36x384xf32, #tpu.memory_space<vmem>>) attributes {dimension_semantics = [#tpu.dimension_semantics<parallel>], iteration_bounds = array<i64: 2>, scalar_prefetch = 0 : i64, scratch_operands = 1 : i64, tpu.core_type = #tpu.core_type<tc>, window_params = [{transform_indices = @transform_0, window_bounds = array<i64: 1, 4, 512>}, {pipeline_mode = #tpu.pipeline_mode<synchronous>, transform_indices = @transform_1, window_bounds = array<i64: 8, 36>}, {pipeline_mode = #tpu.pipeline_mode<synchronous>, transform_indices = @transform_2, window_bounds = array<i64: 8, 1>}, {transform_indices = @transform_3, window_bounds = array<i64: 1, 8, 384>}]} {
    %c0 = arith.constant 0 : index
    %c0_0 = arith.constant 0 : index
    %0 = vector.load %arg2[%c0, %c0_0] : memref<8x36xf32, #tpu.memory_space<vmem>>, vector<8x36xf32>
    %c0_1 = arith.constant 0 : index
    %c0_2 = arith.constant 0 : index
    %1 = vector.load %arg3[%c0_1, %c0_2] : memref<8x1xf32, #tpu.memory_space<vmem>>, vector<8x1xf32>
    %c0_3 = arith.constant 0 : index
    %c0_4 = arith.constant 0 : index
    %c0_5 = arith.constant 0 : index
    %2 = vector.load %arg1[%c0_3, %c0_4, %c0_5] : memref<1x4x512xf32, #tpu.memory_space<vmem>>, vector<1x4x384xf32>
    %3 = vector.shape_cast %2 : vector<1x4x384xf32> to vector<4x384xf32>
    %c0_6 = arith.constant 0 : index
    %c0_7 = arith.constant 0 : index
    %4 = vector.load %arg5[%c0_6, %c0_7] : memref<36x384xf32, #tpu.memory_space<vmem>>, vector<4x384xf32>
    tpu.vector_store %arg5[%c0_6, %c0_7], %3 {strides = array<i32>} : memref<36x384xf32, #tpu.memory_space<vmem>>, vector<4x384xf32>,
    %c0_8 = arith.constant 0 : index
    %c0_9 = arith.constant 0 : index
    %c1 = arith.constant 1 : index
    %5 = vector.load %arg1[%c0_8, %c0_9, %c1] : memref<1x4x512xf32, #tpu.memory_space<vmem>>, vector<1x4x384xf32>
    %6 = vector.shape_cast %5 : vector<1x4x384xf32> to vector<4x384xf32>
    %c4 = arith.constant 4 : index
    %c0_10 = arith.constant 0 : index
    %7 = vector.load %arg5[%c4, %c0_10] : memref<36x384xf32, #tpu.memory_space<vmem>>, vector<4x384xf32>
    tpu.vector_store %arg5[%c4, %c0_10], %6 {strides = array<i32>} : memref<36x384xf32, #tpu.memory_space<vmem>>, vector<4x384xf32>,
    %c0_11 = arith.constant 0 : index
    %c0_12 = arith.constant 0 : index
    %c2 = arith.constant 2 : index
    %8 = vector.load %arg1[%c0_11, %c0_12, %c2] : memref<1x4x512xf32, #tpu.memory_space<vmem>>, vector<1x4x384xf32>
    %9 = vector.shape_cast %8 : vector<1x4x384xf32> to vector<4x384xf32>
    %c8 = arith.constant 8 : index
    %c0_13 = arith.constant 0 : index
    %10 = vector.load %arg5[%c8, %c0_13] : memref<36x384xf32, #tpu.memory_space<vmem>>, vector<4x384xf32>
    tpu.vector_store %arg5[%c8, %c0_13], %9 {strides = array<i32>} : memref<36x384xf32, #tpu.memory_space<vmem>>, vector<4x384xf32>,
    %c0_14 = arith.constant 0 : index
    %c0_15 = arith.constant 0 : index
    %c18 = arith.constant 18 : index
    %11 = vector.load %arg1[%c0_14, %c0_15, %c18] : memref<1x4x512xf32, #tpu.memory_space<vmem>>, vector<1x4x384xf32>
    %12 = vector.shape_cast %11 : vector<1x4x384xf32> to vector<4x384xf32>
    %c12 = arith.constant 12 : index
    %c0_16 = arith.constant 0 : index
    %13 = vector.load %arg5[%c12, %c0_16] : memref<36x384xf32, #tpu.memory_space<vmem>>, vector<4x384xf32>
    tpu.vector_store %arg5[%c12, %c0_16], %12 {strides = array<i32>} : memref<36x384xf32, #tpu.memory_space<vmem>>, vector<4x384xf32>,
    %c0_17 = arith.constant 0 : index
    %c0_18 = arith.constant 0 : index
    %c19 = arith.constant 19 : index
    %14 = vector.load %arg1[%c0_17, %c0_18, %c19] : memref<1x4x512xf32, #tpu.memory_space<vmem>>, vector<1x4x384xf32>
    %15 = vector.shape_cast %14 : vector<1x4x384xf32> to vector<4x384xf32>
    %c16 = arith.constant 16 : index
    %c0_19 = arith.constant 0 : index
    %16 = vector.load %arg5[%c16, %c0_19] : memref<36x384xf32, #tpu.memory_space<vmem>>, vector<4x384xf32>
    tpu.vector_store %arg5[%c16, %c0_19], %15 {strides = array<i32>} : memref<36x384xf32, #tpu.memory_space<vmem>>, vector<4x384xf32>,
    %c0_20 = arith.constant 0 : index
    %c0_21 = arith.constant 0 : index
    %c20 = arith.constant 20 : index
    %17 = vector.load %arg1[%c0_20, %c0_21, %c20] : memref<1x4x512xf32, #tpu.memory_space<vmem>>, vector<1x4x384xf32>
    %18 = vector.shape_cast %17 : vector<1x4x384xf32> to vector<4x384xf32>
    %c20_22 = arith.constant 20 : index
    %c0_23 = arith.constant 0 : index
    %19 = vector.load %arg5[%c20_22, %c0_23] : memref<36x384xf32, #tpu.memory_space<vmem>>, vector<4x384xf32>
    tpu.vector_store %arg5[%c20_22, %c0_23], %18 {strides = array<i32>} : memref<36x384xf32, #tpu.memory_space<vmem>>, vector<4x384xf32>,
    %c0_24 = arith.constant 0 : index
    %c0_25 = arith.constant 0 : index
    %c36 = arith.constant 36 : index
    %20 = vector.load %arg1[%c0_24, %c0_25, %c36] : memref<1x4x512xf32, #tpu.memory_space<vmem>>, vector<1x4x384xf32>
    %21 = vector.shape_cast %20 : vector<1x4x384xf32> to vector<4x384xf32>
    %c24 = arith.constant 24 : index
    %c0_26 = arith.constant 0 : index
    %22 = vector.load %arg5[%c24, %c0_26] : memref<36x384xf32, #tpu.memory_space<vmem>>, vector<4x384xf32>
    tpu.vector_store %arg5[%c24, %c0_26], %21 {strides = array<i32>} : memref<36x384xf32, #tpu.memory_space<vmem>>, vector<4x384xf32>,
    %c0_27 = arith.constant 0 : index
    %c0_28 = arith.constant 0 : index
    %c37 = arith.constant 37 : index
    %23 = vector.load %arg1[%c0_27, %c0_28, %c37] : memref<1x4x512xf32, #tpu.memory_space<vmem>>, vector<1x4x384xf32>
    %24 = vector.shape_cast %23 : vector<1x4x384xf32> to vector<4x384xf32>
    %c28 = arith.constant 28 : index
    %c0_29 = arith.constant 0 : index
    %25 = vector.load %arg5[%c28, %c0_29] : memref<36x384xf32, #tpu.memory_space<vmem>>, vector<4x384xf32>
    tpu.vector_store %arg5[%c28, %c0_29], %24 {strides = array<i32>} : memref<36x384xf32, #tpu.memory_space<vmem>>, vector<4x384xf32>,
    %c0_30 = arith.constant 0 : index
    %c0_31 = arith.constant 0 : index
    %c38 = arith.constant 38 : index
    %26 = vector.load %arg1[%c0_30, %c0_31, %c38] : memref<1x4x512xf32, #tpu.memory_space<vmem>>, vector<1x4x384xf32>
    %27 = vector.shape_cast %26 : vector<1x4x384xf32> to vector<4x384xf32>
    %c32 = arith.constant 32 : index
    %c0_32 = arith.constant 0 : index
    %28 = vector.load %arg5[%c32, %c0_32] : memref<36x384xf32, #tpu.memory_space<vmem>>, vector<4x384xf32>
    tpu.vector_store %arg5[%c32, %c0_32], %27 {strides = array<i32>} : memref<36x384xf32, #tpu.memory_space<vmem>>, vector<4x384xf32>,
    %c0_33 = arith.constant 0 : index
    %c0_34 = arith.constant 0 : index
    %29 = vector.load %arg5[%c0_33, %c0_34] : memref<36x384xf32, #tpu.memory_space<vmem>>, vector<36x384xf32>
    %cst = arith.constant dense<0.000000e+00> : vector<8x384xf32>
    %30 = tpu.matmul %0, %29, %cst {dimension_numbers = #tpu.dot_dimension_numbers<[1], [0], [0], [1], [0, 0, 1, 1], [], []>} : vector<8x36xf32>, vector<36x384xf32>, vector<8x384xf32> -> vector<8x384xf32>
    %31 = vector.broadcast %1 : vector<8x1xf32> to vector<8x384xf32>
    %32 = arith.addf %30, %31 : vector<8x384xf32>
    %c0_35 = arith.constant 0 : index
    %c0_36 = arith.constant 0 : index
    %c0_37 = arith.constant 0 : index
    %33 = vector.load %arg4[%c0_35, %c0_36, %c0_37] : memref<1x8x384xf32, #tpu.memory_space<vmem>>, vector<1x8x384xf32>
    %34 = vector.shape_cast %33 : vector<1x8x384xf32> to vector<8x384xf32>
    %35 = vector.shape_cast %32 : vector<8x384xf32> to vector<1x8x384xf32>
    tpu.vector_store %arg4[%c0_35, %c0_36, %c0_37], %35 {strides = array<i32>} : memref<1x8x384xf32, #tpu.memory_space<vmem>>, vector<1x8x384xf32>,
    return
  }
  func.func @transform_0(%arg0: i32) -> (i32, i32, i32) {
    %c0_i32 = arith.constant 0 : i32
    %c0_i32_0 = arith.constant 0 : i32
    %c0_i32_1 = arith.constant 0 : i32
    return %arg0, %c0_i32, %c0_i32_0 : i32, i32, i32
  }
  func.func @transform_1(%arg0: i32) -> (i32, i32) {
    %c0_i32 = arith.constant 0 : i32
    %c0_i32_0 = arith.constant 0 : i32
    %c0_i32_1 = arith.constant 0 : i32
    return %c0_i32, %c0_i32_0 : i32, i32
  }
  func.func @transform_2(%arg0: i32) -> (i32, i32) {
    %c0_i32 = arith.constant 0 : i32
    %c0_i32_0 = arith.constant 0 : i32
    %c0_i32_1 = arith.constant 0 : i32
    return %c0_i32, %c0_i32_0 : i32, i32
  }
  func.func @transform_3(%arg0: i32) -> (i32, i32, i32) {
    %c0_i32 = arith.constant 0 : i32
    %c0_i32_0 = arith.constant 0 : i32
    %c0_i32_1 = arith.constant 0 : i32
    return %arg0, %c0_i32, %c0_i32_0 : i32, i32, i32
  }
}

</mosaic_0001>

<llo_original>
// kernel: tpu_custom_call.1
$region0: #{tpu_custom_call.1}
  #allocation0 [shape = 'u32[]', space=smem, size = 0x4, offset = 0x4, fixed_abs, tag = 'smem constant byte address 0x4 - core index']
  #allocation1 [shape = 'u32[144,128]{1,0:T(1,128)}', space=vmem, size = 0x12000, scoped, tag = 'internal scratch']
  #allocation2 [shape = 'f32[36,384]{1,0:T(8,128)}', space=vmem, size = 0xf000, scoped, tag = 'scratch operand']
  %s0 = inlined_call_operand.hbm [shape: f32[2,4,512], index: 0, kind: input, shape index: {}]
  %s1 = inlined_call_operand.vmem [shape: f32[8,36], index: 1, kind: input, shape index: {}]
  %s2 = inlined_call_operand.vmem [shape: f32[8,1], index: 2, kind: input, shape index: {}]
  %s3 = inlined_call_operand.hbm [shape: f32[2,8,384], index: 3, kind: output, shape index: {}]
  %s4 = sld [smem:[#allocation0]]
  $region49: #{tpu_custom_call.1} parent=0
    _
  %s6 = ssub.s32 1, %s4
  %s7 = scalar_select 0, %s6, %s4
  $region1: #{tpu_custom_call.1} parent=0
    #allocation3 [shape = 'u8[16384]{0}', space=vmem, size = 0x4000, scoped, tag = 'input window, operand 0']
    #allocation4 [shape = 's32[2]{0}', space=sflag, size = 0x8, scoped, tag = 'scoped memory for tpu_custom_call.1']
    #allocation5 [shape = 's32[2]{0}', space=sflag, size = 0x8, scoped, tag = 'scoped memory for tpu_custom_call.1']
    #allocation6 [shape = 'u8[24576]{0}', space=vmem, size = 0x6000, scoped, tag = 'output window, operand 0']
    %8 = vsyncpa [#allocation4], 0
    %s9 = scalar_lea.sflag [#allocation4], 1
    %10 = vsyncpa %s9, 0
    %11 = vsyncpa [#allocation5], 0
    %s12 = scalar_lea.sflag [#allocation5], 1
    %13 = vsyncpa %s12, 0
    loop: start=0, step=1, limit=4
    $region2: #{tpu_custom_call.1} parent=1 // loop_pre_header
      _
    $region3: #{tpu_custom_call.1} parent=1 // loop_header
      %s15 = sphi 0, %s19
      %p16 = scmp.ge.s32.totalorder %s15, 4
      %s25 = sphi 0, %s27
      %s28 = sphi 0, %s25
      %s29 = sphi 0, %s28
      %s45 = sphi 0, %s29
      %s49 = sphi 0, %s49
      %s51 = sphi 0, %s49
      %s52 = sphi 0, %s51
      %s66 = sphi 0, %s52
      %s70 = sphi 0, %s70
      %s72 = sphi 0, %s70
      %s73 = sphi 0, %s72
      %s87 = sphi 0, %s73
      %s93 = sphi 0, %s95
      %s96 = sphi 0, %s93
      %s97 = sphi 0, %s96
      %s113 = sphi 0, %s97
    $region4: #{tpu_custom_call.1} parent=1 // loop_header_branch
      %18 = sbr.rel (%p16) target = $region8
    $region5: #{tpu_custom_call.1} parent=1 // loop_body
      %s20 = ssub.s32 %s15, 1
      %s21 = ssub.s32 %s15, 2
      %s22 = sadd.s32 %s15, 1
      %s23 = ssub.s32 %s15, %s22
      %p24 = scmp.eq.s32.totalorder %s23, 0
      %s26 = sadd.s32 %s25, 1
      %s27 = scalar_select %p24, %s25, %s26
      %p30 = pneg %p24
      %p31 = scmp.eq.s32.totalorder %s15, 1
      %p32 = por %p30, %p31
      %p33 = scmp.ne.s32.totalorder %s25, %s28
      %p34 = scmp.eq.s32.totalorder %s15, 0
      %p35 = por %p33, %p34
      %p36 = scmp.ne.s32.totalorder %s25, %s28
      %p37 = scmp.eq.s32.totalorder %s20, 1
      %p38 = por %p36, %p37
      %p39 = scmp.ne.s32.totalorder %s28, %s29
      %p40 = scmp.eq.s32.totalorder %s20, 0
      %p41 = por %p39, %p40
      %p42 = scmp.ne.s32.totalorder %s28, %s29
      %p43 = scmp.eq.s32.totalorder %s21, 1
      %p44 = por %p42, %p43
      %p46 = scmp.ne.s32.totalorder %s29, %s45
      %p47 = scmp.eq.s32.totalorder %s21, 0
      %p48 = por %p46, %p47
      %s50 = sadd.s32 %s49, 1
      %p53 = scmp.eq.s32.totalorder %s15, 1
      %p54 = scmp.ne.s32.totalorder %s49, %s51
      %p55 = scmp.eq.s32.totalorder %s15, 0
      %p56 = por %p54, %p55
      %p57 = scmp.ne.s32.totalorder %s49, %s51
      %p58 = scmp.eq.s32.totalorder %s20, 1
      %p59 = por %p57, %p58
      %p60 = scmp.ne.s32.totalorder %s51, %s52
      %p61 = scmp.eq.s32.totalorder %s20, 0
      %p62 = por %p60, %p61
      %p63 = scmp.ne.s32.totalorder %s51, %s52
      %p64 = scmp.eq.s32.totalorder %s21, 1
      %p65 = por %p63, %p64
      %p67 = scmp.ne.s32.totalorder %s52, %s66
      %p68 = scmp.eq.s32.totalorder %s21, 0
      %p69 = por %p67, %p68
      %s71 = sadd.s32 %s70, 1
      %p74 = scmp.eq.s32.totalorder %s15, 1
      %p75 = scmp.ne.s32.totalorder %s70, %s72
      %p76 = scmp.eq.s32.totalorder %s15, 0
      %p77 = por %p75, %p76
      %p78 = scmp.ne.s32.totalorder %s70, %s72
      %p79 = scmp.eq.s32.totalorder %s20, 1
      %p80 = por %p78, %p79
      %p81 = scmp.ne.s32.totalorder %s72, %s73
      %p82 = scmp.eq.s32.totalorder %s20, 0
      %p83 = por %p81, %p82
      %p84 = scmp.ne.s32.totalorder %s72, %s73
      %p85 = scmp.eq.s32.totalorder %s21, 1
      %p86 = por %p84, %p85
      %p88 = scmp.ne.s32.totalorder %s73, %s87
      %p89 = scmp.eq.s32.totalorder %s21, 0
      %p90 = por %p88, %p89
      %s91 = ssub.s32 %s15, %s22
      %p92 = scmp.eq.s32.totalorder %s91, 0
      %s94 = sadd.s32 %s93, 1
      %s95 = scalar_select %p92, %s93, %s94
      %p98 = pneg %p92
      %p99 = scmp.eq.s32.totalorder %s15, 1
      %p100 = por %p98, %p99
      %p101 = scmp.ne.s32.totalorder %s93, %s96
      %p102 = scmp.eq.s32.totalorder %s15, 0
      %p103 = por %p101, %p102
      %p104 = scmp.ne.s32.totalorder %s93, %s96
      %p105 = scmp.eq.s32.totalorder %s20, 1
      %p106 = por %p104, %p105
      %p107 = scmp.ne.s32.totalorder %s96, %s97
      %p108 = scmp.eq.s32.totalorder %s20, 0
      %p109 = por %p107, %p108
      %p110 = scmp.ne.s32.totalorder %s96, %s97
      %p111 = scmp.eq.s32.totalorder %s21, 1
      %p112 = por %p110, %p111
      %p114 = scmp.ne.s32.totalorder %s97, %s113
      %p115 = scmp.eq.s32.totalorder %s21, 0
      %p116 = por %p114, %p115
      %p117 = scmp.le.s32.totalorder 1, %s15
      %p118 = scmp.lt.s32.totalorder %s15, 3
      %p119 = pnand %p117, %p118
      %p120 = pneg %p119
      // Predicated region
      $region9: #{tpu_custom_call.1} parent=5 // pred_check
        _
      $region10: #{tpu_custom_call.1} parent=5 // pred_check_branch
        %122 = sbr.rel (%p119) target = $region12
      $region11: #{tpu_custom_call.1} parent=5 // pred_region
        %s123 = ssub.s32 %s15, 1
        // Predicated region
        $region13: #{tpu_custom_call.1} parent=11 // pred_check
          %p124 = pneg %p62
        $region14: #{tpu_custom_call.1} parent=11 // pred_check_branch
          %126 = sbr.rel (%p124) target = $region16
        $region15: #{tpu_custom_call.1} parent=11 // pred_region
          _
        $region16: #{tpu_custom_call.1} parent=11 // pred_fallthru
          _
        // Predicated region
        $region17: #{tpu_custom_call.1} parent=11 // pred_check
          %p127 = pneg %p83
        $region18: #{tpu_custom_call.1} parent=11 // pred_check_branch
          %129 = sbr.rel (%p127) target = $region20
        $region19: #{tpu_custom_call.1} parent=11 // pred_region
          _
        $region20: #{tpu_custom_call.1} parent=11 // pred_fallthru
          _
      $region12: #{tpu_custom_call.1} parent=5 // pred_fallthru
        _
      %p130 = scmp.lt.s32.totalorder %s15, 2
      // Predicated region
      $region21: #{tpu_custom_call.1} parent=5 // pred_check
        %p131 = pneg %p130
      $region22: #{tpu_custom_call.1} parent=5 // pred_check_branch
        %133 = sbr.rel (%p131) target = $region24
      $region23: #{tpu_custom_call.1} parent=5 // pred_region
        // Predicated region
        $region25: #{tpu_custom_call.1} parent=23 // pred_check
          %p134 = pneg %p35
        $region26: #{tpu_custom_call.1} parent=23 // pred_check_branch
          %136 = sbr.rel (%p134) target = $region28
        $region27: #{tpu_custom_call.1} parent=23 // pred_region
          %s137 = sand.u32 %s25, 1
          %s138 = scalar_lea.sflag [#allocation4], %s137
          %s139 = sand.u32 %s25, 1
          %s140 = smul.addr %s139, 16
          %s141 = scalar_lea.vmem [#allocation3], %s140
          %s143 = ssub.s32 256, 256
          %144 = vsyncadd %s138, %s143
          %s145 = smul.addr %s15, 4
          %s146 = smul.addr %s145, 64
          %s147 = scalar_lea.hbm %s0, %s146
          %s149 = sshll.u32 %s141, 4
          %s150 = int_to_ptr.vmem [resolvable:$true] %s149
          %152 = dma.hbm_to_vmem [thread:$0]  %s147, 256, %s150, %s138
        $region28: #{tpu_custom_call.1} parent=23 // pred_fallthru
          _
      $region24: #{tpu_custom_call.1} parent=5 // pred_fallthru
        _
      %p153 = scmp.le.s32.totalorder 1, %s15
      %p154 = scmp.lt.s32.totalorder %s15, 3
      %p155 = pnand %p153, %p154
      %p156 = pneg %p155
      // Predicated region
      $region29: #{tpu_custom_call.1} parent=5 // pred_check
        _
      $region30: #{tpu_custom_call.1} parent=5 // pred_check_branch
        %158 = sbr.rel (%p155) target = $region32
      $region31: #{tpu_custom_call.1} parent=5 // pred_region
        %s159 = ssub.s32 %s15, 1
        %s160 = sand.u32 %s28, 1
        %s161 = scalar_lea.sflag [#allocation4], %s160
        %s162 = sand.u32 %s28, 1
        %s163 = smul.addr %s162, 16
        %s164 = scalar_lea.vmem [#allocation3], %s163
        // Predicated region
        $region33: #{tpu_custom_call.1} parent=31 // pred_check
          %p165 = pneg %p41
        $region34: #{tpu_custom_call.1} parent=31 // pred_check_branch
          %167 = sbr.rel (%p165) target = $region36
        $region35: #{tpu_custom_call.1} parent=31 // pred_region
          %168 = dma.done %s161, 256
        $region36: #{tpu_custom_call.1} parent=31 // pred_fallthru
          _
        %s169 = sand.u32 %s28, 1
        %s170 = scalar_lea.sflag [#allocation4], %s169
        %s171 = sand.u32 %s28, 1
        %s172 = smul.addr %s171, 16
        %s173 = scalar_lea.vmem [#allocation3], %s172
        %p174 = pneg %p41
        %p175 = pneg %p38
        %p176 = pneg %p62
        %p177 = pneg %p59
        %p178 = pneg %p83
        %p179 = pneg %p80
        %p180 = pneg %p109
        %p181 = pneg %p106
        %s182 = sand.u32 %s96, 1
        %s183 = scalar_lea.sflag [#allocation5], %s182
        %s184 = sand.u32 %s96, 1
        %s185 = smul.addr %s184, 24
        %s186 = scalar_lea.vmem [#allocation6], %s185
        %v187 = vld [vmem:[%s1] sm:$0xff]
        %v188 = vld [vmem:[%s2] sm:$0xff]
        %v189 = vld [vmem:[%s164] sm:$0xff]
        %v190 = vld [vmem:[%s164 + $0x8] sm:$0xf]
        %v192 = vcombine.high %v189, %v189
        %194 = vst [vmem:[#allocation2] sm:$0xf] %v189
        %195 = vst [vmem:[#allocation2 + $0x8] sm:$0xf] %v192
        %196 = vst [vmem:[#allocation2 + $0x10] sm:$0xf] %v190
        %v197 = vld [vmem:[%s164] sm:$0xff]
        %v198 = vld [vmem:[%s164 + $0x8] sm:$0xff]
        %v201 = vcombine.low %v197, %v197
        %v202 = vcombine.low %v198, %v198
        %203 = vrot.lane.b32.xlu0 %v201, 127
        %v204 = vpop.permute.xlu0 %203
        %205 = vrot.lane.b32.xlu0 %v197, 127
        %v206 = vpop.permute.xlu0 %205
        %207 = vrot.lane.b32.xlu0 %v202, 127
        %v208 = vpop.permute.xlu0 %207
        %209 = vrot.lane.b32.xlu0 %v198, 127
        %v210 = vpop.permute.xlu0 %209
        %vm211 = vcmask 1039360
        %v212 = vsel %vm211, %v204, %v206
        %v213 = vsel %vm211, %v206, %v208
        %v214 = vsel %vm211, %v208, %v210
        %218 = vst [vmem:[#allocation2] sm:$0xf0] %v212
        %219 = vst [vmem:[#allocation2 + $0x8] sm:$0xf0] %v213
        %220 = vst [vmem:[#allocation2 + $0x10] sm:$0xf0] %v214
        %v221 = vld [vmem:[%s164] sm:$0xff]
        %v222 = vld [vmem:[%s164 + $0x8] sm:$0xff]
        %v225 = vcombine.high %v221, %v221
        %v226 = vcombine.high %v222, %v222
        %227 = vrot.lane.b32.xlu0 %v221, 126
        %v228 = vpop.permute.xlu0 %227
        %229 = vrot.lane.b32.xlu0 %v225, 126
        %v230 = vpop.permute.xlu0 %229
        %231 = vrot.lane.b32.xlu0 %v222, 126
        %v232 = vpop.permute.xlu0 %231
        %233 = vrot.lane.b32.xlu0 %v226, 126
        %v234 = vpop.permute.xlu0 %233
        %vm235 = vcmask 1031168
        %v236 = vsel %vm235, %v228, %v230
        %v237 = vsel %vm235, %v230, %v232
        %v238 = vsel %vm235, %v232, %v234
        %242 = vst [vmem:[#allocation2 + $0x18] sm:$0xf] %v236
        %243 = vst [vmem:[#allocation2 + $0x20] sm:$0xf] %v237
        %244 = vst [vmem:[#allocation2 + $0x28] sm:$0xf] %v238
        %v245 = vld [vmem:[%s164] sm:$0xff]
        %v246 = vld [vmem:[%s164 + $0x8] sm:$0xff]
        %v249 = vcombine.low %v245, %v245
        %v250 = vcombine.low %v246, %v246
        %251 = vrot.lane.b32.xlu0 %v249, 110
        %v252 = vpop.permute.xlu0 %251
        %253 = vrot.lane.b32.xlu0 %v245, 110
        %v254 = vpop.permute.xlu0 %253
        %255 = vrot.lane.b32.xlu0 %v250, 110
        %v256 = vpop.permute.xlu0 %255
        %257 = vrot.lane.b32.xlu0 %v246, 110
        %v258 = vpop.permute.xlu0 %257
        %vm259 = vcmask 900096
        %v260 = vsel %vm259, %v252, %v254
        %v261 = vsel %vm259, %v254, %v256
        %v262 = vsel %vm259, %v256, %v258
        %266 = vst [vmem:[#allocation2 + $0x18] sm:$0xf0] %v260
        %267 = vst [vmem:[#allocation2 + $0x20] sm:$0xf0] %v261
        %268 = vst [vmem:[#allocation2 + $0x28] sm:$0xf0] %v262
        %v269 = vld [vmem:[%s164] sm:$0xff]
        %v270 = vld [vmem:[%s164 + $0x8] sm:$0xff]
        %v273 = vcombine.high %v269, %v269
        %v274 = vcombine.high %v270, %v270
        %275 = vrot.lane.b32.xlu0 %v269, 109
        %v276 = vpop.permute.xlu0 %275
        %277 = vrot.lane.b32.xlu0 %v273, 109
        %v278 = vpop.permute.xlu0 %277
        %279 = vrot.lane.b32.xlu0 %v270, 109
        %v280 = vpop.permute.xlu0 %279
        %281 = vrot.lane.b32.xlu0 %v274, 109
        %v282 = vpop.permute.xlu0 %281
        %vm283 = vcmask 891904
        %v284 = vsel %vm283, %v276, %v278
        %v285 = vsel %vm283, %v278, %v280
        %v286 = vsel %vm283, %v280, %v282
        %290 = vst [vmem:[#allocation2 + $0x30] sm:$0xf] %v284
        %291 = vst [vmem:[#allocation2 + $0x38] sm:$0xf] %v285
        %292 = vst [vmem:[#allocation2 + $0x40] sm:$0xf] %v286
        %v293 = vld [vmem:[%s164] sm:$0xff]
        %v294 = vld [vmem:[%s164 + $0x8] sm:$0xff]
        %v297 = vcombine.low %v293, %v293
        %v298 = vcombine.low %v294, %v294
        %299 = vrot.lane.b32.xlu0 %v297, 108
        %v300 = vpop.permute.xlu0 %299
        %301 = vrot.lane.b32.xlu0 %v293, 108
        %v302 = vpop.permute.xlu0 %301
        %303 = vrot.lane.b32.xlu0 %v298, 108
        %v304 = vpop.permute.xlu0 %303
        %305 = vrot.lane.b32.xlu0 %v294, 108
        %v306 = vpop.permute.xlu0 %305
        %vm307 = vcmask 883712
        %v308 = vsel %vm307, %v300, %v302
        %v309 = vsel %vm307, %v302, %v304
        %v310 = vsel %vm307, %v304, %v306
        %314 = vst [vmem:[#allocation2 + $0x30] sm:$0xf0] %v308
        %315 = vst [vmem:[#allocation2 + $0x38] sm:$0xf0] %v309
        %316 = vst [vmem:[#allocation2 + $0x40] sm:$0xf0] %v310
        %v317 = vld [vmem:[%s164] sm:$0xff]
        %v318 = vld [vmem:[%s164 + $0x8] sm:$0xff]
        %v321 = vcombine.high %v317, %v317
        %v322 = vcombine.high %v318, %v318
        %323 = vrot.lane.b32.xlu0 %v317, 92
        %v324 = vpop.permute.xlu0 %323
        %325 = vrot.lane.b32.xlu0 %v321, 92
        %v326 = vpop.permute.xlu0 %325
        %327 = vrot.lane.b32.xlu0 %v318, 92
        %v328 = vpop.permute.xlu0 %327
        %329 = vrot.lane.b32.xlu0 %v322, 92
        %v330 = vpop.permute.xlu0 %329
        %vm331 = vcmask 752640
        %v332 = vsel %vm331, %v324, %v326
        %v333 = vsel %vm331, %v326, %v328
        %v334 = vsel %vm331, %v328, %v330
        %338 = vst [vmem:[#allocation2 + $0x48] sm:$0xf] %v332
        %339 = vst [vmem:[#allocation2 + $0x50] sm:$0xf] %v333
        %340 = vst [vmem:[#allocation2 + $0x58] sm:$0xf] %v334
        %v341 = vld [vmem:[%s164] sm:$0xff]
        %v342 = vld [vmem:[%s164 + $0x8] sm:$0xff]
        %v345 = vcombine.low %v341, %v341
        %v346 = vcombine.low %v342, %v342
        %347 = vrot.lane.b32.xlu0 %v345, 91
        %v348 = vpop.permute.xlu0 %347
        %349 = vrot.lane.b32.xlu0 %v341, 91
        %v350 = vpop.permute.xlu0 %349
        %351 = vrot.lane.b32.xlu0 %v346, 91
        %v352 = vpop.permute.xlu0 %351
        %353 = vrot.lane.b32.xlu0 %v342, 91
        %v354 = vpop.permute.xlu0 %353
        %vm355 = vcmask 744448
        %v356 = vsel %vm355, %v348, %v350
        %v357 = vsel %vm355, %v350, %v352
        %v358 = vsel %vm355, %v352, %v354
        %362 = vst [vmem:[#allocation2 + $0x48] sm:$0xf0] %v356
        %363 = vst [vmem:[#allocation2 + $0x50] sm:$0xf0] %v357
        %364 = vst [vmem:[#allocation2 + $0x58] sm:$0xf0] %v358
        %v365 = vld [vmem:[%s164] sm:$0xff]
        %v366 = vld [vmem:[%s164 + $0x8] sm:$0xff]
        %v369 = vcombine.high %v365, %v365
        %v370 = vcombine.high %v366, %v366
        %371 = vrot.lane.b32.xlu0 %v365, 90
        %v372 = vpop.permute.xlu0 %371
        %373 = vrot.lane.b32.xlu0 %v369, 90
        %v374 = vpop.permute.xlu0 %373
        %375 = vrot.lane.b32.xlu0 %v366, 90
        %v376 = vpop.permute.xlu0 %375
        %377 = vrot.lane.b32.xlu0 %v370, 90
        %v378 = vpop.permute.xlu0 %377
        %vm379 = vcmask 736256
        %v380 = vsel %vm379, %v372, %v374
        %v381 = vsel %vm379, %v374, %v376
        %v382 = vsel %vm379, %v376, %v378
        %386 = vst [vmem:[#allocation2 + $0x60] sm:$0xf] %v380
        %387 = vst [vmem:[#allocation2 + $0x68] sm:$0xf] %v381
        %388 = vst [vmem:[#allocation2 + $0x70] sm:$0xf] %v382
        %v389 = vld [vmem:[#allocation2] sm:$0xff]
        %v390 = vld [vmem:[#allocation2 + $0x8] sm:$0xff]
        %v391 = vld [vmem:[#allocation2 + $0x10] sm:$0xff]
        %v392 = vld [vmem:[#allocation2 + $0x18] sm:$0xff]
        %v393 = vld [vmem:[#allocation2 + $0x20] sm:$0xff]
        %v394 = vld [vmem:[#allocation2 + $0x28] sm:$0xff]
        %v395 = vld [vmem:[#allocation2 + $0x30] sm:$0xff]
        %v396 = vld [vmem:[#allocation2 + $0x38] sm:$0xff]
        %v397 = vld [vmem:[#allocation2 + $0x40] sm:$0xff]
        %v398 = vld [vmem:[#allocation2 + $0x48] sm:$0xff]
        %v399 = vld [vmem:[#allocation2 + $0x50] sm:$0xff]
        %v400 = vld [vmem:[#allocation2 + $0x58] sm:$0xff]
        %v401 = vld [vmem:[#allocation2 + $0x60] sm:$0xf]
        %v402 = vld [vmem:[#allocation2 + $0x68] sm:$0xf]
        %v403 = vld [vmem:[#allocation2 + $0x70] sm:$0xf]
        %405 = vset.pattern.permute.xlu0 0
        %406 = vperm.xlu0 %405, %v188
        %v407 = vpop.permute.xlu0 %406
        %vm409 = vcmask 293888
        %v411 = vsel %vm409, %v187, 0
        %vm413 = vcmask 1043456
        %v415 = vsel %vm413, %v401, 0
        %v418 = vsel %vm413, %v402, 0
        %v421 = vsel %vm413, %v403, 0
        %423 = vmatprep.subr.mxu0 %v390
        %424 = vmatpush1.msra.mxu0 %v389
        %425 = vmatprep.subr.mxu0 %v393
        %426 = vmatpush1.msra.mxu0 %v392
        %427 = vmatprep.subr.mxu0 %v396
        %428 = vmatpush1.msra.mxu0 %v395
        %429 = vmatprep.subr.mxu0 %v399
        %430 = vmatpush1.msra.mxu0 %v398
        %431 = vmatprep.subr.mxu0 %v418
        %432 = vmatpush1.msra.mxu0 %v415
        %433 = vmatprep.subr.mxu0 0.0
        %434 = vmatpush1.msra.mxu0 0.0
        %435 = vmatprep.subr.mxu0 0.0
        %436 = vmatpush1.msra.mxu0 0.0
        %437 = vmatprep.subr.mxu0 0.0
        %438 = vmatpush1.msra.mxu0 0.0
        %439 = vmatprep.subr.mxu0 0.0
        %440 = vmatpush1.msra.mxu0 0.0
        %441 = vmatprep.subr.mxu0 0.0
        %442 = vmatpush1.msra.mxu0 0.0
        %443 = vmatprep.subr.mxu0 0.0
        %444 = vmatpush1.msra.mxu0 0.0
        %445 = vmatprep.subr.mxu0 0.0
        %446 = vmatpush1.msra.mxu0 0.0
        %447 = vmatprep.subr.mxu0 0.0
        %448 = vmatpush1.msra.mxu0 0.0
        %449 = vmatprep.subr.mxu0 0.0
        %450 = vmatpush1.msra.mxu0 0.0
        %451 = vmatprep.subr.mxu0 0.0
        %452 = vmatpush1.msra.mxu0 0.0
        %453 = vmatprep.subr.mxu0 0.0
        %454 = vmatpush1.msra.mxu0 0.0
        %455 = vmatprep.subr.mxu0 0.0
        %456 = vmatpush1.msra.mxu0 0.0
        %457 = vmatprep.subr.mxu0 0.0
        %458 = vmatpush1.msra.mxu0 0.0
        %459 = vmatprep.subr.mxu0 0.0
        %460 = vmatpush1.msra.mxu0 0.0
        %461 = vmatprep.subr.mxu0 0.0
        %462 = vmatpush1.msra.mxu0 0.0
        %463 = vmatprep.subr.mxu0 0.0
        %464 = vmatpush1.msra.mxu0 0.0
        %465 = vmatprep.subr.mxu0 0.0
        %466 = vmatpush1.msra.mxu0 0.0
        %467 = vmatprep.subr.mxu0 0.0
        %468 = vmatpush1.msra.mxu0 0.0
        %469 = vmatprep.subr.mxu0 0.0
        %470 = vmatpush1.msra.mxu0 0.0
        %471 = vmatprep.subr.mxu0 0.0
        %472 = vmatpush1.msra.mxu0 0.0
        %473 = vmatprep.subr.mxu0 0.0
        %474 = vmatpush1.msra.mxu0 0.0
        %475 = vmatprep.subr.mxu0 0.0
        %476 = vmatpush1.msra.mxu0 0.0
        %477 = vmatprep.subr.mxu0 0.0
        %478 = vmatpush1.msra.mxu0 0.0
        %479 = vmatprep.subr.mxu0 0.0
        %480 = vmatpush1.msra.mxu0 0.0
        %481 = vmatprep.subr.mxu0 0.0
        %482 = vmatpush1.msra.mxu0 0.0
        %483 = vmatprep.subr.mxu0 0.0
        %484 = vmatpush1.msra.mxu0 0.0
        %485 = vmatprep.subr.mxu0 0.0
        %486 = vmatpush1.msra.mxu0 0.0
        %487 = vmatprep.mubr.f32.mxu0 0.0
        %488 = vmatmul.mubr.f32.gmra.mrb[0].mxu0 %v411
        %v489 = vpop.f32.mrb[0].mxu0
        %v490 = vadd.f32 %v407, %v489
        %v491 = vpop.f32.mrb[0].mxu0
        %v492 = vadd.f32 %v407, %v491
        %493 = vdwg.mxu0
        %494 = vmatprep.subr.mxu0 0.0
        %495 = vmatpush1.msra.mxu0 %v391
        %496 = vmatprep.subr.mxu0 0.0
        %497 = vmatpush1.msra.mxu0 %v394
        %498 = vmatprep.subr.mxu0 0.0
        %499 = vmatpush1.msra.mxu0 %v397
        %500 = vmatprep.subr.mxu0 0.0
        %501 = vmatpush1.msra.mxu0 %v400
        %502 = vmatprep.subr.mxu0 0.0
        %503 = vmatpush1.msra.mxu0 %v421
        %504 = vmatprep.subr.mxu0 0.0
        %505 = vmatpush1.msra.mxu0 0.0
        %506 = vmatprep.subr.mxu0 0.0
        %507 = vmatpush1.msra.mxu0 0.0
        %508 = vmatprep.subr.mxu0 0.0
        %509 = vmatpush1.msra.mxu0 0.0
        %510 = vmatprep.subr.mxu0 0.0
        %511 = vmatpush1.msra.mxu0 0.0
        %512 = vmatprep.subr.mxu0 0.0
        %513 = vmatpush1.msra.mxu0 0.0
        %514 = vmatprep.subr.mxu0 0.0
        %515 = vmatpush1.msra.mxu0 0.0
        %516 = vmatprep.subr.mxu0 0.0
        %517 = vmatpush1.msra.mxu0 0.0
        %518 = vmatprep.subr.mxu0 0.0
        %519 = vmatpush1.msra.mxu0 0.0
        %520 = vmatprep.subr.mxu0 0.0
        %521 = vmatpush1.msra.mxu0 0.0
        %522 = vmatprep.subr.mxu0 0.0
        %523 = vmatpush1.msra.mxu0 0.0
        %524 = vmatprep.subr.mxu0 0.0
        %525 = vmatpush1.msra.mxu0 0.0
        %526 = vmatprep.subr.mxu0 0.0
        %527 = vmatpush1.msra.mxu0 0.0
        %528 = vmatprep.subr.mxu0 0.0
        %529 = vmatpush1.msra.mxu0 0.0
        %530 = vmatprep.subr.mxu0 0.0
        %531 = vmatpush1.msra.mxu0 0.0
        %532 = vmatprep.subr.mxu0 0.0
        %533 = vmatpush1.msra.mxu0 0.0
        %534 = vmatprep.subr.mxu0 0.0
        %535 = vmatpush1.msra.mxu0 0.0
        %536 = vmatprep.subr.mxu0 0.0
        %537 = vmatpush1.msra.mxu0 0.0
        %538 = vmatprep.subr.mxu0 0.0
        %539 = vmatpush1.msra.mxu0 0.0
        %540 = vmatprep.subr.mxu0 0.0
        %541 = vmatpush1.msra.mxu0 0.0
        %542 = vmatprep.subr.mxu0 0.0
        %543 = vmatpush1.msra.mxu0 0.0
        %544 = vmatprep.subr.mxu0 0.0
        %545 = vmatpush1.msra.mxu0 0.0
        %546 = vmatprep.subr.mxu0 0.0
        %547 = vmatpush1.msra.mxu0 0.0
        %548 = vmatprep.subr.mxu0 0.0
        %549 = vmatpush1.msra.mxu0 0.0
        %550 = vmatprep.subr.mxu0 0.0
        %551 = vmatpush1.msra.mxu0 0.0
        %552 = vmatprep.subr.mxu0 0.0
        %553 = vmatpush1.msra.mxu0 0.0
        %554 = vmatprep.subr.mxu0 0.0
        %555 = vmatpush1.msra.mxu0 0.0
        %556 = vmatprep.subr.mxu0 0.0
        %557 = vmatpush1.msra.mxu0 0.0
        %558 = vmatprep.mubr.f32.mxu0 0.0
        %559 = vmatmul.mubr.f32.gmra.mrb[0].mxu0 %v411
        %v560 = vpop.f32.mrb[0].mxu0
        %v561 = vadd.f32 %v407, %v560
        %v562 = vpop.f32.mrb[0].mxu0
        %563 = vdwg.mxu0
        %564 = vst [vmem:[%s186] sm:$0xff] %v490
        %565 = vst [vmem:[%s186 + $0x8] sm:$0xff] %v492
        %566 = vst [vmem:[%s186 + $0x10] sm:$0xff] %v561
        %s567 = sand.u32 %s96, 1
        %s568 = scalar_lea.sflag [#allocation5], %s567
        %s569 = sand.u32 %s96, 1
        %s570 = smul.addr %s569, 24
        %s571 = scalar_lea.vmem [#allocation6], %s570
        // Predicated region
        $region37: #{tpu_custom_call.1} parent=31 // pred_check
          %p572 = pneg %p106
        $region38: #{tpu_custom_call.1} parent=31 // pred_check_branch
          %574 = sbr.rel (%p572) target = $region40
        $region39: #{tpu_custom_call.1} parent=31 // pred_region
          %s576 = ssub.s32 384, 384
          %577 = vsyncadd %s568, %s576
          %s578 = smul.addr %s20, 3
          %s579 = smul.addr %s578, 128
          %s580 = scalar_lea.hbm %s3, %s579
          %s582 = sshll.u32 %s571, 4
          %s583 = int_to_ptr.vmem [resolvable:$true] %s582
          %585 = dma.vmem_to_hbm [thread:$0]  %s583, 384, %s580, %s568
        $region40: #{tpu_custom_call.1} parent=31 // pred_fallthru
          _
      $region32: #{tpu_custom_call.1} parent=5 // pred_fallthru
        _
      %p586 = scmp.le.s32.totalorder 2, %s15
      // Predicated region
      $region41: #{tpu_custom_call.1} parent=5 // pred_check
        %p587 = pneg %p586
      $region42: #{tpu_custom_call.1} parent=5 // pred_check_branch
        %589 = sbr.rel (%p587) target = $region44
      $region43: #{tpu_custom_call.1} parent=5 // pred_region
        %s590 = ssub.s32 %s15, 2
        // Predicated region
        $region45: #{tpu_custom_call.1} parent=43 // pred_check
          %p591 = pneg %p112
        $region46: #{tpu_custom_call.1} parent=43 // pred_check_branch
          %593 = sbr.rel (%p591) target = $region48
        $region47: #{tpu_custom_call.1} parent=43 // pred_region
          %s594 = sand.u32 %s97, 1
          %s595 = scalar_lea.sflag [#allocation5], %s594
          %s596 = sand.u32 %s97, 1
          %s597 = smul.addr %s596, 24
          %s598 = scalar_lea.vmem [#allocation6], %s597
          %599 = dma.done %s595, 384
        $region48: #{tpu_custom_call.1} parent=43 // pred_fallthru
          _
      $region44: #{tpu_custom_call.1} parent=5 // pred_fallthru
        _
    $region6: #{tpu_custom_call.1} parent=1 // loop_footer
      %s19 = sadd.s32 1, %s15
    $region7: #{tpu_custom_call.1} parent=1 // loop_footer_branch
      %14 = sbr.rel target = $region3
    $region8: #{tpu_custom_call.1} parent=1 // loop_exit
      _
    %600 = vsyncpa [#allocation4], 1
    %s601 = scalar_lea.sflag [#allocation4], 1
    %602 = vsyncpa %s601, 1
    %603 = vsyncpa [#allocation5], 1
    %s604 = scalar_lea.sflag [#allocation5], 1
    %605 = vsyncpa %s604, 1

</llo_original>
